<compile_context>
chip_gen: v7x
topology: tpu7x:2x2x1
jax: 0.10.0
libtpu: 0.0.40
codegen_flags: <defaults>
</compile_context>

<pallas_src>
import functools

import jax
import jax.numpy as jnp
from jax.experimental import pallas as pl
from jax.experimental.pallas import tpu as pltpu


# -----------------------------------------------------------------------------
# Patch embedding: one fused matmul   out = xp @ W + bias + pos
# (Conv2d(C, hidden, kernel=P, stride=P) == flatten patches + matmul.)
# -----------------------------------------------------------------------------
def _patch_kernel(x_ref, w_ref, b_ref, pos_ref, o_ref):
    y = jnp.dot(x_ref[...], w_ref[...], preferred_element_type=jnp.float32)
    o_ref[...] = (y + b_ref[...] + pos_ref[...]).astype(o_ref.dtype)


def patch_embed(xp, w, b, pos):
    M, K = xp.shape
    _, N = w.shape
    # Pick the largest power-of-two row tile that divides M (full M fallback).
    tm = M
    for cand in (2048, 1024, 512, 256, 128, 64, 32, 16, 8):
        if M % cand == 0:
            tm = cand
            break
    return pl.pallas_call(
        _patch_kernel,
        out_shape=jax.ShapeDtypeStruct((M, N), jnp.float32),
        grid=(M // tm,),
        in_specs=[
            pl.BlockSpec((tm, K), lambda i: (i, 0)),
            pl.BlockSpec((K, N), lambda i: (0, 0)),
            pl.BlockSpec((1, N), lambda i: (0, 0)),
            pl.BlockSpec((tm, N), lambda i: (i, 0)),
        ],
        out_specs=pl.BlockSpec((tm, N), lambda i: (i, 0)),
        compiler_params=pltpu.CompilerParams(
            dimension_semantics=("parallel",)),
    )(xp, w, b.reshape(1, N).astype(jnp.float32), pos)


# -----------------------------------------------------------------------------
# Bilinear x2 interpolation matrix (UpsamplingBilinear2d => align_corners=True)
# -----------------------------------------------------------------------------
def _bilinear_matrix(n):
    m = 2 * n
    if n == 1:
        return jnp.ones((m, 1), jnp.float32)
    src = jnp.arange(m, dtype=jnp.float32) * (n - 1) / (m - 1)
    lo = jnp.floor(src).astype(jnp.int32)
    hi = jnp.minimum(lo + 1, n - 1)
    frac = src - lo.astype(jnp.float32)
    U = jnp.zeros((m, n), jnp.float32)
    U = U.at[jnp.arange(m), lo].add(1.0 - frac)
    U = U.at[jnp.arange(m), hi].add(frac)
    return U


def fold_bn(gamma, beta, mean, var, eps=1e-5):
    scale = gamma / jnp.sqrt(var + eps)
    bias = beta - mean * scale
    return scale, bias


# -----------------------------------------------------------------------------
# Fully fused binary_seg kernel (one grid step per batch image, all in VMEM):
#   upsample x2 -> conv3x3(+BN)+ReLU -> upsample x2 -> conv1x1(+BN)+ReLU
#   -> conv1x1 -> sigmoid
# Scalar params (BN-folded conv weights / biases) live in one SMEM vector.
# -----------------------------------------------------------------------------
def _binary_seg_kernel(C, H, W,
                       x_ref, uh1_ref, uw1_ref, uh2_ref, uw2_ref, p_ref,
                       o_ref, pad_ref):
    f32 = jnp.float32
    H2, W2, H4, W4 = 2 * H, 2 * W, 4 * H, 4 * W

    OFF_W3 = 0                      # (C*C*9) folded 3x3 conv weights
    OFF_B1 = OFF_W3 + C * C * 9     # (C)     folded BN1 bias
    OFF_W1 = OFF_B1 + C             # (C*C)   folded 1x1 conv weights
    OFF_B2 = OFF_W1 + C * C         # (C)     folded BN2 bias
    OFF_WS = OFF_B2 + C             # (C)     final seg conv weights
    OFF_BS = OFF_WS + C             # (1)     final seg conv bias

    # ---- UpsamplingBilinear2d(x2) #1:  y1[c] = Uh1 @ x[c] @ Uw1
    uh1 = uh1_ref[...]
    uw1 = uw1_ref[...]
    y1 = []
    for c in range(C):
        t = jnp.dot(uh1, x_ref[0, c], preferred_element_type=f32)   # (2H, W)
        y1.append(jnp.dot(t, uw1, preferred_element_type=f32))      # (2H, 2W)

    # ---- Conv2dReLU 3x3, pad=1 (BN folded) via halo scratch + shifted adds
    pad_ref[...] = jnp.zeros_like(pad_ref)
    for c in range(C):
        pad_ref[c, 1:H2 + 1, 1:W2 + 1] = y1[c]

    # Hoist the 9 shifted views per input channel (load once, reuse C times).
    taps = [[pad_ref[ci, kh:kh + H2, kw:kw + W2]
             for kh in range(3) for kw in range(3)]
            for ci in range(C)]

    y2 = []
    for co in range(C):
        acc = jnp.zeros((H2, W2), f32)
        for ci in range(C):
            for k in range(9):
                wgt = p_ref[OFF_W3 + (co * C + ci) * 9 + k]
                acc = acc + wgt * taps[ci][k]
        y2.append(jnp.maximum(acc + p_ref[OFF_B1 + co], 0.0))

    # ---- UpsamplingBilinear2d(x2) #2
    uh2 = uh2_ref[...]
    uw2 = uw2_ref[...]
    y3 = []
    for c in range(C):
        t = jnp.dot(uh2, y2[c], preferred_element_type=f32)          # (4H, 2W)
        y3.append(jnp.dot(t, uw2, preferred_element_type=f32))       # (4H, 4W)

    # ---- Conv2dReLU 1x1 (BN folded)
    y4 = []
    for co in range(C):
        acc = jnp.zeros((H4, W4), f32)
        for ci in range(C):
            acc = acc + p_ref[OFF_W1 + co * C + ci] * y3[ci]
        y4.append(jnp.maximum(acc + p_ref[OFF_B2 + co], 0.0))

    # ---- final Conv2d(C, 1, 1) + Sigmoid
    acc = jnp.zeros((H4, W4), f32)
    for ci in range(C):
        acc = acc + p_ref[OFF_WS + ci] * y4[ci]
    o_ref[0, 0] = jax.nn.sigmoid(acc + p_ref[OFF_BS])


def binary_seg(x, params):
    B, C, H, W = x.shape
    H2, W2, H4, W4 = 2 * H, 2 * W, 4 * H, 4 * W

    Uh1 = _bilinear_matrix(H)            # (2H, H)
    Uw1 = _bilinear_matrix(W).T          # (W, 2W)
    Uh2 = _bilinear_matrix(H2)           # (4H, 2H)
    Uw2 = _bilinear_matrix(W2).T         # (2W, 4W)

    s1, b1 = fold_bn(params["bn1_gamma"], params["bn1_beta"],
                     params["bn1_mean"], params["bn1_var"])
    s2, b2 = fold_bn(params["bn2_gamma"], params["bn2_beta"],
                     params["bn2_mean"], params["bn2_var"])
    # Fold BN scale into conv weights host-side (kernel only adds bias).
    w3f = params["conv3_w"] * s1[:, None, None, None]        # (C, C, 3, 3)
    w1f = params["conv1_w"].reshape(C, C) * s2[:, None]      # (C, C)
    wsf = params["seg_w"].reshape(C)                         # (C,)
    bsf = params["seg_b"].reshape(1)                         # (1,)

    pvec = jnp.concatenate(
        [w3f.reshape(-1), b1, w1f.reshape(-1), b2, wsf, bsf]
    ).astype(jnp.float32)

    kernel = functools.partial(_binary_seg_kernel, C, H, W)
    return pl.pallas_call(
        kernel,
        out_shape=jax.ShapeDtypeStruct((B, 1, H4, W4), jnp.float32),
        grid=(B,),
        in_specs=[
            pl.BlockSpec((1, C, H, W), lambda b: (b, 0, 0, 0)),
            pl.BlockSpec((H2, H), lambda b: (0, 0)),
            pl.BlockSpec((W, W2), lambda b: (0, 0)),
            pl.BlockSpec((H4, H2), lambda b: (0, 0)),
            pl.BlockSpec((W2, W4), lambda b: (0, 0)),
            pl.BlockSpec(memory_space=pltpu.MemorySpace.SMEM),
        ],
        out_specs=pl.BlockSpec((1, 1, H4, W4), lambda b: (b, 0, 0, 0)),
        scratch_shapes=[pltpu.VMEM((C, H2 + 2, W2 + 2), jnp.float32)],
        compiler_params=pltpu.CompilerParams(
            dimension_semantics=("parallel",)),
    )(x, Uh1, Uw1, Uh2, Uw2, pvec)


# -----------------------------------------------------------------------------
# Parameters (deterministic, matching Embeddings.__init__ shapes)
# -----------------------------------------------------------------------------
def init_params(key, in_channels, hidden_size, patch_size, n_patches):
    ks = jax.random.split(key, 6)
    C, P = in_channels, patch_size
    return {
        "patch_size": P,
        "patch_w": 0.02 * jax.random.normal(ks[0], (hidden_size, C, P, P), jnp.float32),
        "patch_b": 0.02 * jax.random.normal(ks[1], (hidden_size,), jnp.float32),
        "pos_emb": jnp.zeros((1, n_patches, hidden_size), jnp.float32),
        "conv3_w": 0.05 * jax.random.normal(ks[2], (C, C, 3, 3), jnp.float32),
        "bn1_gamma": jnp.ones((C,), jnp.float32),
        "bn1_beta": jnp.zeros((C,), jnp.float32),
        "bn1_mean": jnp.zeros((C,), jnp.float32),
        "bn1_var": jnp.ones((C,), jnp.float32),
        "conv1_w": 0.05 * jax.random.normal(ks[3], (C, C, 1, 1), jnp.float32),
        "bn2_gamma": jnp.ones((C,), jnp.float32),
        "bn2_beta": jnp.zeros((C,), jnp.float32),
        "bn2_mean": jnp.zeros((C,), jnp.float32),
        "bn2_var": jnp.ones((C,), jnp.float32),
        "seg_w": 0.05 * jax.random.normal(ks[4], (1, C, 1, 1), jnp.float32),
        "seg_b": 0.02 * jax.random.normal(ks[5], (1,), jnp.float32),
    }


# -----------------------------------------------------------------------------
# Forward pass == Embeddings.forward (non-hybrid: features is None)
# -----------------------------------------------------------------------------
def embeddings_forward(x, params):
    B, C, H, W = x.shape
    P = params["patch_size"]
    hidden = params["patch_w"].shape[0]
    nH, nW = H // P, W // P
    n_patches = nH * nW

    # ---- patch embeddings + position embeddings (dropout = identity in eval)
    xp = x.reshape(B, C, nH, P, nW, P).transpose(0, 2, 4, 1, 3, 5)
    xp = xp.reshape(B * n_patches, C * P * P)
    w_pe = params["patch_w"].reshape(hidden, C * P * P).T       # (C*P*P, hidden)
    pos = jnp.broadcast_to(params["pos_emb"], (B, n_patches, hidden))
    pos = pos.reshape(B * n_patches, hidden)
    emb = patch_embed(xp, w_pe, params["patch_b"], pos)
    embeddings = emb.reshape(B, n_patches, hidden)

    # ---- binary_seg on the (detached) original input: one fused kernel
    seg = binary_seg(x, params)

    features = None
    return embeddings, features, seg


# -----------------------------------------------------------------------------
if __name__ == "__main__":
    B, C, H, W = 2, 4, 16, 16
    patch_size = 4
    hidden_size = 32
    n_patches = (H // patch_size) * (W // patch_size)

    key = jax.random.PRNGKey(0)
    k_x, k_p = jax.random.split(key)
    x = jax.random.normal(k_x, (B, C, H, W), jnp.float32)
    params = init_params(k_p, C, hidden_size, patch_size, n_patches)

    embeddings, features, seg = embeddings_forward(x, params)
    jax.block_until_ready(embeddings)
    jax.block_until_ready(seg)

    assert embeddings.shape == (B, n_patches, hidden_size), embeddings.shape
    assert features is None
    assert seg.shape == (B, 1, 4 * H, 4 * W), seg.shape
    assert bool(jnp.all(jnp.isfinite(embeddings)))
    assert bool(jnp.all(jnp.isfinite(seg)))
    assert bool(jnp.all((seg >= 0.0) & (seg <= 1.0)))

    print("KERNEL_OK")
</pallas_src>

<mosaic_0001>
module attributes {stable_mosaic.version = 11 : i64} {
  func.func @_patch_kernel(%arg0: i32, %arg1: memref<32x64xf32, #tpu.memory_space<vmem>>, %arg2: memref<64x32xf32, #tpu.memory_space<vmem>>, %arg3: memref<1x32xf32, #tpu.memory_space<vmem>>, %arg4: memref<32x32xf32, #tpu.memory_space<vmem>>, %arg5: memref<32x32xf32, #tpu.memory_space<vmem>>) attributes {dimension_semantics = [#tpu.dimension_semantics<parallel>], iteration_bounds = array<i64: 1>, scalar_prefetch = 0 : i64, scratch_operands = 0 : i64, tpu.core_type = #tpu.core_type<tc>, window_params = [{transform_indices = @transform_0, window_bounds = array<i64: 32, 64>}, {pipeline_mode = #tpu.pipeline_mode<synchronous>, transform_indices = @transform_1, window_bounds = array<i64: 64, 32>}, {pipeline_mode = #tpu.pipeline_mode<synchronous>, transform_indices = @transform_2, window_bounds = array<i64: 1, 32>}, {transform_indices = @transform_3, window_bounds = array<i64: 32, 32>}, {transform_indices = @transform_4, window_bounds = array<i64: 32, 32>}]} {
    %c0 = arith.constant 0 : index
    %c0_0 = arith.constant 0 : index
    %0 = vector.load %arg1[%c0, %c0_0] : memref<32x64xf32, #tpu.memory_space<vmem>>, vector<32x64xf32>
    %c0_1 = arith.constant 0 : index
    %c0_2 = arith.constant 0 : index
    %1 = vector.load %arg2[%c0_1, %c0_2] : memref<64x32xf32, #tpu.memory_space<vmem>>, vector<64x32xf32>
    %cst = arith.constant dense<0.000000e+00> : vector<32x32xf32>
    %2 = tpu.matmul %0, %1, %cst {dimension_numbers = #tpu.dot_dimension_numbers<[1], [0], [0], [1], [0, 0, 1, 1], [], []>} : vector<32x64xf32>, vector<64x32xf32>, vector<32x32xf32> -> vector<32x32xf32>
    %c0_3 = arith.constant 0 : index
    %c0_4 = arith.constant 0 : index
    %3 = vector.load %arg3[%c0_3, %c0_4] : memref<1x32xf32, #tpu.memory_space<vmem>>, vector<1x32xf32>
    %4 = vector.broadcast %3 : vector<1x32xf32> to vector<32x32xf32>
    %5 = arith.addf %2, %4 : vector<32x32xf32>
    %c0_5 = arith.constant 0 : index
    %c0_6 = arith.constant 0 : index
    %6 = vector.load %arg4[%c0_5, %c0_6] : memref<32x32xf32, #tpu.memory_space<vmem>>, vector<32x32xf32>
    %7 = arith.addf %5, %6 : vector<32x32xf32>
    %c0_7 = arith.constant 0 : index
    %c0_8 = arith.constant 0 : index
    %8 = vector.load %arg5[%c0_7, %c0_8] : memref<32x32xf32, #tpu.memory_space<vmem>>, vector<32x32xf32>
    tpu.vector_store %arg5[%c0_7, %c0_8], %7 {strides = array<i32>} : memref<32x32xf32, #tpu.memory_space<vmem>>, vector<32x32xf32>,
    return
  }
  func.func @transform_0(%arg0: i32) -> (i32, i32) {
    %c0_i32 = arith.constant 0 : i32
    %c0_i32_0 = arith.constant 0 : i32
    return %arg0, %c0_i32 : i32, i32
  }
  func.func @transform_1(%arg0: i32) -> (i32, i32) {
    %c0_i32 = arith.constant 0 : i32
    %c0_i32_0 = arith.constant 0 : i32
    %c0_i32_1 = arith.constant 0 : i32
    return %c0_i32, %c0_i32_0 : i32, i32
  }
  func.func @transform_2(%arg0: i32) -> (i32, i32) {
    %c0_i32 = arith.constant 0 : i32
    %c0_i32_0 = arith.constant 0 : i32
    %c0_i32_1 = arith.constant 0 : i32
    return %c0_i32, %c0_i32_0 : i32, i32
  }
  func.func @transform_3(%arg0: i32) -> (i32, i32) {
    %c0_i32 = arith.constant 0 : i32
    %c0_i32_0 = arith.constant 0 : i32
    return %arg0, %c0_i32 : i32, i32
  }
  func.func @transform_4(%arg0: i32) -> (i32, i32) {
    %c0_i32 = arith.constant 0 : i32
    %c0_i32_0 = arith.constant 0 : i32
    return %arg0, %c0_i32 : i32, i32
  }
}

</mosaic_0001>

<llo_original>
// kernel: tpu_custom_call.1
$region0: #{tpu_custom_call.1}
  #allocation0 [shape = 'u32[]', space=smem, size = 0x4, offset = 0x4, fixed_abs, tag = 'smem constant byte address 0x4 - core index']
  #allocation1 [shape = 'u32[144,128]{1,0:T(1,128)}', space=vmem, size = 0x12000, scoped, tag = 'internal scratch']
  %s0 = inlined_call_operand.vmem [shape: f32[32,64], index: 0, kind: input, shape index: {}]
  %s1 = inlined_call_operand.vmem [shape: f32[64,32], index: 1, kind: input, shape index: {}]
  %s2 = inlined_call_operand.vmem [shape: f32[1,32], index: 2, kind: input, shape index: {}]
  %s3 = inlined_call_operand.vmem [shape: f32[32,32], index: 3, kind: input, shape index: {}]
  %s4 = inlined_call_operand.hbm [shape: f32[32,32], index: 4, kind: output, shape index: {}]
  %s5 = sld [smem:[#allocation0]]
  $region26: #{tpu_custom_call.1} parent=0
    _
  %s7 = ssub.s32 1, %s5
  %s8 = scalar_select 0, %s7, %s5
  $region1: #{tpu_custom_call.1} parent=0
    #allocation2 [shape = 'u8[16384]{0}', space=vmem, size = 0x4000, scoped, tag = 'output window, operand 0, single buffered']
    #allocation3 [shape = 's32[1]{0}', space=sflag, size = 0x4, scoped, tag = 'scoped memory for tpu_custom_call.1']
    %9 = vsyncpa [#allocation3], 0
    // Predicated region
    $region2: #{tpu_custom_call.1} parent=1 // pred_check
      _
    $region3: #{tpu_custom_call.1} parent=1 // pred_check_branch
      %11 = sbr.rel (0) target = $region5
    $region4: #{tpu_custom_call.1} parent=1 // pred_region
      _
    $region5: #{tpu_custom_call.1} parent=1 // pred_fallthru
      _
    // Predicated region
    $region6: #{tpu_custom_call.1} parent=1 // pred_check
      _
    $region7: #{tpu_custom_call.1} parent=1 // pred_check_branch
      %13 = sbr.rel (0) target = $region9
    $region8: #{tpu_custom_call.1} parent=1 // pred_region
      _
    $region9: #{tpu_custom_call.1} parent=1 // pred_fallthru
      _
    // Predicated region
    $region10: #{tpu_custom_call.1} parent=1 // pred_check
      _
    $region11: #{tpu_custom_call.1} parent=1 // pred_check_branch
      %15 = sbr.rel (0) target = $region13
    $region12: #{tpu_custom_call.1} parent=1 // pred_region
      _
    $region13: #{tpu_custom_call.1} parent=1 // pred_fallthru
      _
    // Predicated region
    $region14: #{tpu_custom_call.1} parent=1 // pred_check
      _
    $region15: #{tpu_custom_call.1} parent=1 // pred_check_branch
      %17 = sbr.rel (0) target = $region17
    $region16: #{tpu_custom_call.1} parent=1 // pred_region
      _
    $region17: #{tpu_custom_call.1} parent=1 // pred_fallthru
      _
    %v18 = vld [vmem:[%s0] sm:$0xff]
    %v19 = vld [vmem:[%s0 + $0x8] sm:$0xff]
    %v20 = vld [vmem:[%s0 + $0x10] sm:$0xff]
    %v21 = vld [vmem:[%s0 + $0x18] sm:$0xff]
    %v22 = vld [vmem:[%s1] sm:$0xff]
    %v23 = vld [vmem:[%s1 + $0x8] sm:$0xff]
    %v24 = vld [vmem:[%s1 + $0x10] sm:$0xff]
    %v25 = vld [vmem:[%s1 + $0x18] sm:$0xff]
    %v26 = vld [vmem:[%s1 + $0x20] sm:$0xff]
    %v27 = vld [vmem:[%s1 + $0x28] sm:$0xff]
    %v28 = vld [vmem:[%s1 + $0x30] sm:$0xff]
    %v29 = vld [vmem:[%s1 + $0x38] sm:$0xff]
    %v30 = vld [vmem:[%s2] sm:$0x1]
    %v32 = vlaneseq
    %v33 = vshrl.u32 %v32, 7
    %v34 = vsub.s32 0, %v33
    %v35 = vrot.slane %v30, %v34
    %vm37 = vcmask 523264
    %v39 = vsel %vm37, %v18, 0
    %v42 = vsel %vm37, %v19, 0
    %v45 = vsel %vm37, %v20, 0
    %v48 = vsel %vm37, %v21, 0
    %50 = vmatprep.subr.mxu0 0.0
    %51 = vmatpush1.msra.mxu0 %v22
    %52 = vmatprep.subr.mxu0 0.0
    %53 = vmatpush1.msra.mxu0 %v23
    %54 = vmatprep.subr.mxu0 0.0
    %55 = vmatpush1.msra.mxu0 %v24
    %56 = vmatprep.subr.mxu0 0.0
    %57 = vmatpush1.msra.mxu0 %v25
    %58 = vmatprep.subr.mxu0 0.0
    %59 = vmatpush1.msra.mxu0 %v26
    %60 = vmatprep.subr.mxu0 0.0
    %61 = vmatpush1.msra.mxu0 %v27
    %62 = vmatprep.subr.mxu0 0.0
    %63 = vmatpush1.msra.mxu0 %v28
    %64 = vmatprep.subr.mxu0 0.0
    %65 = vmatpush1.msra.mxu0 %v29
    %66 = vmatprep.subr.mxu0 0.0
    %67 = vmatpush1.msra.mxu0 0.0
    %68 = vmatprep.subr.mxu0 0.0
    %69 = vmatpush1.msra.mxu0 0.0
    %70 = vmatprep.subr.mxu0 0.0
    %71 = vmatpush1.msra.mxu0 0.0
    %72 = vmatprep.subr.mxu0 0.0
    %73 = vmatpush1.msra.mxu0 0.0
    %74 = vmatprep.subr.mxu0 0.0
    %75 = vmatpush1.msra.mxu0 0.0
    %76 = vmatprep.subr.mxu0 0.0
    %77 = vmatpush1.msra.mxu0 0.0
    %78 = vmatprep.subr.mxu0 0.0
    %79 = vmatpush1.msra.mxu0 0.0
    %80 = vmatprep.subr.mxu0 0.0
    %81 = vmatpush1.msra.mxu0 0.0
    %82 = vmatprep.subr.mxu0 0.0
    %83 = vmatpush1.msra.mxu0 0.0
    %84 = vmatprep.subr.mxu0 0.0
    %85 = vmatpush1.msra.mxu0 0.0
    %86 = vmatprep.subr.mxu0 0.0
    %87 = vmatpush1.msra.mxu0 0.0
    %88 = vmatprep.subr.mxu0 0.0
    %89 = vmatpush1.msra.mxu0 0.0
    %90 = vmatprep.subr.mxu0 0.0
    %91 = vmatpush1.msra.mxu0 0.0
    %92 = vmatprep.subr.mxu0 0.0
    %93 = vmatpush1.msra.mxu0 0.0
    %94 = vmatprep.subr.mxu0 0.0
    %95 = vmatpush1.msra.mxu0 0.0
    %96 = vmatprep.subr.mxu0 0.0
    %97 = vmatpush1.msra.mxu0 0.0
    %98 = vmatprep.subr.mxu0 0.0
    %99 = vmatpush1.msra.mxu0 0.0
    %100 = vmatprep.subr.mxu0 0.0
    %101 = vmatpush1.msra.mxu0 0.0
    %102 = vmatprep.subr.mxu0 0.0
    %103 = vmatpush1.msra.mxu0 0.0
    %104 = vmatprep.subr.mxu0 0.0
    %105 = vmatpush1.msra.mxu0 0.0
    %106 = vmatprep.subr.mxu0 0.0
    %107 = vmatpush1.msra.mxu0 0.0
    %108 = vmatprep.subr.mxu0 0.0
    %109 = vmatpush1.msra.mxu0 0.0
    %110 = vmatprep.subr.mxu0 0.0
    %111 = vmatpush1.msra.mxu0 0.0
    %112 = vmatprep.subr.mxu0 0.0
    %113 = vmatpush1.msra.mxu0 0.0
    %114 = vmatprep.mubr.f32.mxu0 0.0
    %115 = vmatmul.mubr.f32.gmra.mrb[0].mxu0 %v39
    %v116 = vpop.f32.mrb[0].mxu0
    %v117 = vadd.f32 %v35, %v116
    %v118 = vpop.f32.mrb[0].mxu0
    %119 = vmatprep.mubr.f32.mxu0 0.0
    %120 = vmatmul.mubr.f32.gmra.mrb[0].mxu0 %v42
    %v121 = vpop.f32.mrb[0].mxu0
    %v122 = vadd.f32 %v35, %v121
    %v123 = vpop.f32.mrb[0].mxu0
    %124 = vmatprep.mubr.f32.mxu0 0.0
    %125 = vmatmul.mubr.f32.gmra.mrb[0].mxu0 %v45
    %v126 = vpop.f32.mrb[0].mxu0
    %v127 = vadd.f32 %v35, %v126
    %v128 = vpop.f32.mrb[0].mxu0
    %129 = vmatprep.mubr.f32.mxu0 0.0
    %130 = vmatmul.mubr.f32.gmra.mrb[0].mxu0 %v48
    %v131 = vpop.f32.mrb[0].mxu0
    %v132 = vadd.f32 %v35, %v131
    %v133 = vpop.f32.mrb[0].mxu0
    %134 = vdwg.mxu0
    %v135 = vld [vmem:[%s3] sm:$0xff]
    %v136 = vld [vmem:[%s3 + $0x8] sm:$0xff]
    %v137 = vld [vmem:[%s3 + $0x10] sm:$0xff]
    %v138 = vld [vmem:[%s3 + $0x18] sm:$0xff]
    %v139 = vadd.f32 %v117, %v135
    %v140 = vadd.f32 %v122, %v136
    %v141 = vadd.f32 %v127, %v137
    %v142 = vadd.f32 %v132, %v138
    %vm143 = vcmask 261120
    %144 = vst.msk [vmem:[#allocation2] sm:$0xff] %vm143, %v139
    %145 = vst.msk [vmem:[#allocation2 + $0x8] sm:$0xff] %vm143, %v140
    %146 = vst.msk [vmem:[#allocation2 + $0x10] sm:$0xff] %vm143, %v141
    %147 = vst.msk [vmem:[#allocation2 + $0x18] sm:$0xff] %vm143, %v142
    // Predicated region
    $region18: #{tpu_custom_call.1} parent=1 // pred_check
      _
    $region19: #{tpu_custom_call.1} parent=1 // pred_check_branch
      %149 = sbr.rel (0) target = $region21
    $region20: #{tpu_custom_call.1} parent=1 // pred_region
      %s151 = ssub.s32 512, 512
      %152 = vsyncadd [#allocation3], %s151
      %s153 = sshll.u32 [#allocation2], 4
      %s154 = int_to_ptr.vmem [resolvable:$true] %s153
      %159 = dma.vmem_to_hbm [thread:$0]  %s154, 512, %s4, [#allocation3], 128, 128, 8
    $region21: #{tpu_custom_call.1} parent=1 // pred_fallthru
      _
    // Predicated region
    $region22: #{tpu_custom_call.1} parent=1 // pred_check
      _
    $region23: #{tpu_custom_call.1} parent=1 // pred_check_branch
      %161 = sbr.rel (0) target = $region25
    $region24: #{tpu_custom_call.1} parent=1 // pred_region
      %162 = dma.done [#allocation3], 512
    $region25: #{tpu_custom_call.1} parent=1 // pred_fallthru
      _
    %163 = vsyncpa [#allocation3], 1

</llo_original>
